<compile_context>
chip_gen: v7x
topology: tpu7x:2x2x1
jax: 0.10.0
libtpu: 0.0.40
codegen_flags: <defaults>
</compile_context>

<pallas_src>
import functools

import jax
import jax.numpy as jnp
from jax.experimental import pallas as pl
from jax.experimental.pallas import tpu as pltpu


VMEM_LIMIT_BYTES = 32 * 1024 * 1024   # safe on v5e/v6e (128 MiB phys) and v7x (64 MiB phys)
TARGET_BLOCK_BYTES = 2 * 1024 * 1024  # ~2 MiB streaming tiles (near HBM-roofline plateau)
LANE_TARGET = 4096                    # lane-tile cap (multiple of 128)
FUSED_VMEM_BUDGET = 12 * 1024 * 1024  # footprint cap for the fused single-pass path


# ---------------------------------------------------------------------------
# Small helpers
# ---------------------------------------------------------------------------

def _round_up(x, m):
    return (x + m - 1) // m * m


def _largest_divisor(n, target):
    """Largest divisor of n that is <= target (always >= 1)."""
    target = max(1, min(int(target), n))
    for d in range(target, 0, -1):
        if n % d == 0:
            return d
    return 1


def _smallest_factor_geq2(n):
    d = 2
    while d * d <= n:
        if n % d == 0:
            return d
        d += 1
    return n


def _sublane_unit(dtype):
    """Sublane packing unit: 8 for 32-bit, 16 for 16-bit, 32 for 8-bit dtypes."""
    return {4: 8, 2: 16, 1: 32}.get(jnp.dtype(dtype).itemsize, 8)


def _sum_leading(v):
    """Sum a (K, C, 1) value over axis 0 (keepdims) using only static slices + adds.

    Avoids leading-axis vector reductions; O(log K) vector adds of tiny vectors.
    """
    k = v.shape[0]
    extra = None
    while k > 1:
        if k % 2:
            last = v[k - 1:k]
            extra = last if extra is None else extra + last
            k -= 1
            v = v[:k]
        half = k // 2
        v = v[:half] + v[half:k]
        k = half
    return v if extra is None else v + extra


def _scale_shift(sum_c, sq_c, w, b, inv_count, eps):
    """Per-channel scale/shift from per-channel sum / sum-of-squares (all (1, C, 1))."""
    mean = sum_c * inv_count
    var = jnp.maximum(sq_c * inv_count - mean * mean, 0.0)  # cancellation guard
    scale = jax.lax.rsqrt(var + eps) * w
    shift = b - mean * scale
    return scale, shift


# ---------------------------------------------------------------------------
# Kernels
# ---------------------------------------------------------------------------

def _fused_bn_kernel(x_ref, w_ref, b_ref, o_ref, *, inv_count, eps):
    """Whole tensor resident in VMEM: stats + normalize in a single pass."""
    x = x_ref[...].astype(jnp.float32)                            # (N, C, HW)
    sum_c = _sum_leading(jnp.sum(x, axis=-1, keepdims=True))      # (1, C, 1)
    sq_c = _sum_leading(jnp.sum(x * x, axis=-1, keepdims=True))   # (1, C, 1)
    scale, shift = _scale_shift(sum_c, sq_c, w_ref[...], b_ref[...], inv_count, eps)
    o_ref[...] = (x * scale + shift).astype(o_ref.dtype)


def _stats_kernel(x_ref, sum_ref, sq_ref):
    """Accumulate per-channel partial sum / sum-of-squares over lane tiles.

    x_ref: (bn, C, T).  sum_ref / sq_ref: (1, C, 1) f32 accumulators, resident
    across the lane-tile (last, 'arbitrary') grid axis.
    """
    @pl.when(pl.program_id(2) == 0)
    def _():
        sum_ref[...] = jnp.zeros_like(sum_ref)
        sq_ref[...] = jnp.zeros_like(sq_ref)

    x = x_ref[...].astype(jnp.float32)
    sum_ref[...] += _sum_leading(jnp.sum(x, axis=-1, keepdims=True))
    sq_ref[...] += _sum_leading(jnp.sum(x * x, axis=-1, keepdims=True))


def _normalize_kernel(psum_ref, psq_ref, w_ref, b_ref, x_ref, o_ref, *, inv_count, eps):
    """Per-channel finalize folded into the streaming normalize pass.

    psum_ref / psq_ref: (n_parts, C, 1) partial sums (tiny, VMEM resident).
    x_ref / o_ref: (bn, C, T) streaming tiles.
    """
    sum_c = _sum_leading(psum_ref[...])
    sq_c = _sum_leading(psq_ref[...])
    scale, shift = _scale_shift(sum_c, sq_c, w_ref[...], b_ref[...], inv_count, eps)
    x = x_ref[...].astype(jnp.float32)
    o_ref[...] = (x * scale + shift).astype(o_ref.dtype)


# ---------------------------------------------------------------------------
# Forward wrapper
# ---------------------------------------------------------------------------

def batchnorm2d_bin_forward(x, weight, bias, eps=1e-5, force_two_pass=False):
    """Training-mode BatchNorm2d forward.  x: (N, C, H, W); weight/bias: (C,)."""
    if x.ndim != 4:
        raise ValueError(f"expected 4D input (got {x.ndim}D input)")
    N, C, H, W = x.shape
    HW = H * W
    itemsize = jnp.dtype(x.dtype).itemsize
    sub = _sublane_unit(x.dtype)
    inv_count = 1.0 / float(N * HW)

    x3 = x.reshape(N, C, HW)                          # free reshape (NCHW is contiguous)
    w3 = weight.astype(jnp.float32).reshape(1, C, 1)
    b3 = bias.astype(jnp.float32).reshape(1, C, 1)

    # ---- Fused single-pass path (tensor resident in VMEM) -------------------
    c_sub = _round_up(C, sub)            # sublane-rounded channel dim (layout footprint)
    c_f32 = _round_up(C, 8)
    lanes_full = _round_up(HW, 128)
    fused_footprint = (4 * N * c_sub * lanes_full * itemsize   # in + out, double-buffered
                       + N * c_f32 * lanes_full * 4)           # f32 working copy
    if not force_two_pass and fused_footprint <= FUSED_VMEM_BUDGET:
        out3 = pl.pallas_call(
            functools.partial(_fused_bn_kernel, inv_count=inv_count, eps=eps),
            out_shape=jax.ShapeDtypeStruct((N, C, HW), x.dtype),
            grid_spec=pltpu.PrefetchScalarGridSpec(
                num_scalar_prefetch=0,
                grid=(1,),
                in_specs=[
                    pl.BlockSpec((N, C, HW), lambda i: (0, 0, 0)),
                    pl.BlockSpec((1, C, 1), lambda i: (0, 0, 0)),
                    pl.BlockSpec((1, C, 1), lambda i: (0, 0, 0)),
                ],
                out_specs=pl.BlockSpec((N, C, HW), lambda i: (0, 0, 0)),
            ),
            compiler_params=pltpu.CompilerParams(
                dimension_semantics=("arbitrary",),
                vmem_limit_bytes=VMEM_LIMIT_BYTES),
            cost_estimate=pl.CostEstimate(
                flops=5 * N * C * HW, transcendentals=C,
                bytes_accessed=2 * N * C * HW * itemsize),
        )(x3, w3, b3)
        return out3.reshape(N, C, H, W)

    # ---- Streaming two-pass path --------------------------------------------
    # Lane tiling: multiple of 128 when possible; full extent when H*W is small
    # and not 128-divisible; pad with zeros only when large AND not divisible
    # (zero padding does not perturb the sums; the mean uses the true count).
    if HW % 128 == 0:
        hw_p = HW
        T = 128 * _largest_divisor(HW // 128, LANE_TARGET // 128)
    elif HW <= LANE_TARGET:
        hw_p = HW
        T = HW                                        # full-extent lane block (legal)
    else:
        hw_p = _round_up(HW, 128)
        T = 128 * _largest_divisor(hw_p // 128, LANE_TARGET // 128)
    if hw_p != HW:
        x3 = jnp.pad(x3, ((0, 0), (0, 0), (0, hw_p - HW)))

    # Batch-block size: fill ~TARGET_BLOCK_BYTES per tile (layout-rounded bytes).
    plane_bytes = c_sub * _round_up(T, 128) * itemsize
    bn = _largest_divisor(N, max(1, TARGET_BLOCK_BYTES // plane_bytes))
    n_nb = N // bn
    n_lane = hw_p // T

    # Lane split: guarantees >= 2 blocks on a 'parallel' axis of the stats pass
    # even when N (hence n_nb) is tiny, so v7x can use both TensorCores.
    n_sp = _smallest_factor_geq2(n_lane) if (n_nb == 1 and n_lane >= 2) else 1
    n_lt = n_lane // n_sp
    n_parts = n_nb * n_sp

    # ---- Pass 1: streaming per-channel partial sums --------------------------
    psum, psq = pl.pallas_call(
        _stats_kernel,
        out_shape=(
            jax.ShapeDtypeStruct((n_parts, C, 1), jnp.float32),
            jax.ShapeDtypeStruct((n_parts, C, 1), jnp.float32),
        ),
        grid_spec=pltpu.PrefetchScalarGridSpec(
            num_scalar_prefetch=0,
            grid=(n_nb, n_sp, n_lt),
            in_specs=[
                pl.BlockSpec((bn, C, T), lambda nb, sp, lt: (nb, 0, sp * n_lt + lt)),
            ],
            out_specs=[
                pl.BlockSpec((1, C, 1), lambda nb, sp, lt: (nb * n_sp + sp, 0, 0)),
                pl.BlockSpec((1, C, 1), lambda nb, sp, lt: (nb * n_sp + sp, 0, 0)),
            ],
        ),
        compiler_params=pltpu.CompilerParams(
            dimension_semantics=("parallel", "parallel", "arbitrary"),
            vmem_limit_bytes=VMEM_LIMIT_BYTES),
        cost_estimate=pl.CostEstimate(
            flops=3 * N * C * hw_p, transcendentals=0,
            bytes_accessed=N * C * hw_p * itemsize),
    )(x3)

    # ---- Pass 2: in-kernel finalize + streaming normalize --------------------
    out3 = pl.pallas_call(
        functools.partial(_normalize_kernel, inv_count=inv_count, eps=eps),
        out_shape=jax.ShapeDtypeStruct((N, C, hw_p), x.dtype),
        grid_spec=pltpu.PrefetchScalarGridSpec(
            num_scalar_prefetch=0,
            grid=(n_nb, n_lane),
            in_specs=[
                pl.BlockSpec((n_parts, C, 1), lambda nb, lt: (0, 0, 0)),
                pl.BlockSpec((n_parts, C, 1), lambda nb, lt: (0, 0, 0)),
                pl.BlockSpec((1, C, 1), lambda nb, lt: (0, 0, 0)),
                pl.BlockSpec((1, C, 1), lambda nb, lt: (0, 0, 0)),
                pl.BlockSpec((bn, C, T), lambda nb, lt: (nb, 0, lt)),
            ],
            out_specs=pl.BlockSpec((bn, C, T), lambda nb, lt: (nb, 0, lt)),
        ),
        compiler_params=pltpu.CompilerParams(
            dimension_semantics=("parallel", "parallel"),
            vmem_limit_bytes=VMEM_LIMIT_BYTES),
        cost_estimate=pl.CostEstimate(
            flops=2 * N * C * hw_p + 8 * n_parts * C, transcendentals=C,
            bytes_accessed=2 * N * C * hw_p * itemsize),
    )(psum, psq, w3, b3, x3)

    if hw_p != HW:
        out3 = out3[:, :, :HW]
    return out3.reshape(N, C, H, W)


# ---------------------------------------------------------------------------
# Reference & test
# ---------------------------------------------------------------------------

def _reference_bn(x, weight, bias, eps=1e-5):
    xf = x.astype(jnp.float32)
    mean = jnp.mean(xf, axis=(0, 2, 3), keepdims=True)
    var = jnp.mean((xf - mean) ** 2, axis=(0, 2, 3), keepdims=True)
    w = weight.astype(jnp.float32).reshape(1, -1, 1, 1)
    b = bias.astype(jnp.float32).reshape(1, -1, 1, 1)
    return ((xf - mean) / jnp.sqrt(var + eps) * w + b).astype(x.dtype)


if __name__ == "__main__":
    key = jax.random.PRNGKey(0)
    kx, kw, kx2, kx3 = jax.random.split(key, 4)

    # Module parameters per reset_parameters() with affine_flag=2:
    #   weight ~ U[0, 1),  bias = 0.
    # TODO(synk): running_mean/running_var/num_batches_tracked buffer updates are
    # training-mode module-state side effects and are not part of the forward output.

    # 1) Module-consistent small shape -> fused single-pass (VMEM-resident) path.
    N, C, H, W = 2, 4, 16, 16
    x = jax.random.normal(kx, (N, C, H, W), dtype=jnp.float32)
    weight = jax.random.uniform(kw, (C,), dtype=jnp.float32)
    bias = jnp.zeros((C,), dtype=jnp.float32)

    fwd = jax.jit(functools.partial(batchnorm2d_bin_forward, eps=1e-5))
    out = jax.block_until_ready(fwd(x, weight, bias))
    ref = _reference_bn(x, weight, bias, eps=1e-5)
    assert out.shape == (N, C, H, W)
    err = float(jnp.max(jnp.abs(out - ref)))
    assert err < 1e-4, f"fused path mismatch vs reference: {err}"

    # 2) Exercise the streaming two-pass path (lane-split stats + in-kernel finalize).
    fwd2 = jax.jit(functools.partial(batchnorm2d_bin_forward, eps=1e-5, force_two_pass=True))
    x2 = jax.random.normal(kx2, (2, 8, 128, 128), dtype=jnp.float32)
    w2 = jax.random.uniform(jax.random.fold_in(kw, 1), (8,), dtype=jnp.float32)
    b2 = jnp.zeros((8,), dtype=jnp.float32)
    out2 = jax.block_until_ready(fwd2(x2, w2, b2))
    err2 = float(jnp.max(jnp.abs(out2 - _reference_bn(x2, w2, b2, eps=1e-5))))
    assert err2 < 1e-3, f"two-pass path mismatch vs reference: {err2}"

    # 3) Non-128-multiple spatial extent (full-extent lane-block fallback, no padding).
    x3_in = jax.random.normal(kx3, (2, 4, 24, 20), dtype=jnp.float32)
    out3 = jax.block_until_ready(fwd2(x3_in, weight, bias))
    err3 = float(jnp.max(jnp.abs(out3 - _reference_bn(x3_in, weight, bias, eps=1e-5))))
    assert err3 < 1e-3, f"ragged-lane path mismatch vs reference: {err3}"

    print("KERNEL_OK")
</pallas_src>

<mosaic_0001>
module attributes {stable_mosaic.version = 11 : i64} {
  func.func @_fused_bn_kernel(%arg0: i32, %arg1: memref<2x4x256xf32, #tpu.memory_space<vmem>>, %arg2: memref<1x4x1xf32, #tpu.memory_space<vmem>>, %arg3: memref<1x4x1xf32, #tpu.memory_space<vmem>>, %arg4: memref<2x4x256xf32, #tpu.memory_space<vmem>>) attributes {dimension_semantics = [#tpu.dimension_semantics<arbitrary>], iteration_bounds = array<i64: 1>, scalar_prefetch = 0 : i64, scratch_operands = 0 : i64, tpu.core_type = #tpu.core_type<tc>, window_params = [{pipeline_mode = #tpu.pipeline_mode<synchronous>, transform_indices = @transform_0, window_bounds = array<i64: 2, 4, 256>}, {pipeline_mode = #tpu.pipeline_mode<synchronous>, transform_indices = @transform_1, window_bounds = array<i64: 1, 4, 1>}, {pipeline_mode = #tpu.pipeline_mode<synchronous>, transform_indices = @transform_2, window_bounds = array<i64: 1, 4, 1>}, {pipeline_mode = #tpu.pipeline_mode<synchronous>, transform_indices = @transform_3, window_bounds = array<i64: 2, 4, 256>}]} {
    %c0 = arith.constant 0 : index
    %c0_0 = arith.constant 0 : index
    %c0_1 = arith.constant 0 : index
    %0 = vector.load %arg1[%c0, %c0_0, %c0_1] : memref<2x4x256xf32, #tpu.memory_space<vmem>>, vector<2x4x256xf32>
    %cst = arith.constant dense<0.000000e+00> : vector<2x4xf32>
    %1 = vector.multi_reduction <add>, %0, %cst [2] : vector<2x4x256xf32> to vector<2x4xf32>
    %2 = vector.shape_cast %1 : vector<2x4xf32> to vector<2x4x1xf32>
    %3 = vector.extract_strided_slice %2 {offsets = [0, 0, 0], sizes = [1, 4, 1], strides = [1, 1, 1]} : vector<2x4x1xf32> to vector<1x4x1xf32>
    %4 = vector.extract_strided_slice %2 {offsets = [1, 0, 0], sizes = [1, 4, 1], strides = [1, 1, 1]} : vector<2x4x1xf32> to vector<1x4x1xf32>
    %5 = arith.addf %3, %4 : vector<1x4x1xf32>
    %6 = arith.mulf %0, %0 : vector<2x4x256xf32>
    %cst_2 = arith.constant dense<0.000000e+00> : vector<2x4xf32>
    %7 = vector.multi_reduction <add>, %6, %cst_2 [2] : vector<2x4x256xf32> to vector<2x4xf32>
    %8 = vector.shape_cast %7 : vector<2x4xf32> to vector<2x4x1xf32>
    %9 = vector.extract_strided_slice %8 {offsets = [0, 0, 0], sizes = [1, 4, 1], strides = [1, 1, 1]} : vector<2x4x1xf32> to vector<1x4x1xf32>
    %10 = vector.extract_strided_slice %8 {offsets = [1, 0, 0], sizes = [1, 4, 1], strides = [1, 1, 1]} : vector<2x4x1xf32> to vector<1x4x1xf32>
    %11 = arith.addf %9, %10 : vector<1x4x1xf32>
    %c0_3 = arith.constant 0 : index
    %c0_4 = arith.constant 0 : index
    %c0_5 = arith.constant 0 : index
    %12 = vector.load %arg2[%c0_3, %c0_4, %c0_5] : memref<1x4x1xf32, #tpu.memory_space<vmem>>, vector<1x4x1xf32>
    %c0_6 = arith.constant 0 : index
    %c0_7 = arith.constant 0 : index
    %c0_8 = arith.constant 0 : index
    %13 = vector.load %arg3[%c0_6, %c0_7, %c0_8] : memref<1x4x1xf32, #tpu.memory_space<vmem>>, vector<1x4x1xf32>
    %cst_9 = arith.constant 0.001953125 : f32
    %14 = vector.broadcast %cst_9 : f32 to vector<1x4x1xf32>
    %15 = arith.mulf %5, %14 : vector<1x4x1xf32>
    %cst_10 = arith.constant 0.001953125 : f32
    %16 = vector.broadcast %cst_10 : f32 to vector<1x4x1xf32>
    %17 = arith.mulf %11, %16 : vector<1x4x1xf32>
    %18 = arith.mulf %15, %15 : vector<1x4x1xf32>
    %19 = arith.subf %17, %18 : vector<1x4x1xf32>
    %cst_11 = arith.constant 0.000000e+00 : f32
    %20 = vector.broadcast %cst_11 : f32 to vector<1x4x1xf32>
    %21 = arith.maximumf %19, %20 : vector<1x4x1xf32>
    %cst_12 = arith.constant 9.99999974E-6 : f32
    %22 = vector.broadcast %cst_12 : f32 to vector<1x4x1xf32>
    %23 = arith.addf %21, %22 : vector<1x4x1xf32>
    %24 = math.rsqrt %23 : vector<1x4x1xf32>
    %25 = arith.mulf %24, %12 : vector<1x4x1xf32>
    %26 = arith.mulf %15, %25 : vector<1x4x1xf32>
    %27 = arith.subf %13, %26 : vector<1x4x1xf32>
    %28 = vector.broadcast %25 : vector<1x4x1xf32> to vector<2x4x256xf32>
    %29 = arith.mulf %0, %28 : vector<2x4x256xf32>
    %30 = vector.broadcast %27 : vector<1x4x1xf32> to vector<2x4x256xf32>
    %31 = arith.addf %29, %30 : vector<2x4x256xf32>
    %c0_13 = arith.constant 0 : index
    %c0_14 = arith.constant 0 : index
    %c0_15 = arith.constant 0 : index
    %32 = vector.load %arg4[%c0_13, %c0_14, %c0_15] : memref<2x4x256xf32, #tpu.memory_space<vmem>>, vector<2x4x256xf32>
    tpu.vector_store %arg4[%c0_13, %c0_14, %c0_15], %31 {strides = array<i32>} : memref<2x4x256xf32, #tpu.memory_space<vmem>>, vector<2x4x256xf32>,
    return
  }
  func.func @transform_0(%arg0: i32) -> (i32, i32, i32) {
    %c0_i32 = arith.constant 0 : i32
    %c0_i32_0 = arith.constant 0 : i32
    %c0_i32_1 = arith.constant 0 : i32
    %c0_i32_2 = arith.constant 0 : i32
    return %c0_i32, %c0_i32_0, %c0_i32_1 : i32, i32, i32
  }
  func.func @transform_1(%arg0: i32) -> (i32, i32, i32) {
    %c0_i32 = arith.constant 0 : i32
    %c0_i32_0 = arith.constant 0 : i32
    %c0_i32_1 = arith.constant 0 : i32
    %c0_i32_2 = arith.constant 0 : i32
    return %c0_i32, %c0_i32_0, %c0_i32_1 : i32, i32, i32
  }
  func.func @transform_2(%arg0: i32) -> (i32, i32, i32) {
    %c0_i32 = arith.constant 0 : i32
    %c0_i32_0 = arith.constant 0 : i32
    %c0_i32_1 = arith.constant 0 : i32
    %c0_i32_2 = arith.constant 0 : i32
    return %c0_i32, %c0_i32_0, %c0_i32_1 : i32, i32, i32
  }
  func.func @transform_3(%arg0: i32) -> (i32, i32, i32) {
    %c0_i32 = arith.constant 0 : i32
    %c0_i32_0 = arith.constant 0 : i32
    %c0_i32_1 = arith.constant 0 : i32
    %c0_i32_2 = arith.constant 0 : i32
    return %c0_i32, %c0_i32_0, %c0_i32_1 : i32, i32, i32
  }
}

</mosaic_0001>

<llo_original>
// kernel: batchnorm2d_bin_forward.1
$region0: #{batchnorm2d_bin_forward.1}
  #allocation0 [shape = 'u32[]', space=smem, size = 0x4, offset = 0x4, fixed_abs, tag = 'smem constant byte address 0x4 - core index']
  #allocation1 [shape = 'u32[144,128]{1,0:T(1,128)}', space=vmem, size = 0x12000, scoped, tag = 'internal scratch']
  %s0 = inlined_call_operand.vmem [shape: f32[2,4,256], index: 0, kind: input, shape index: {}]
  %s1 = inlined_call_operand.vmem [shape: f32[1,4,1], index: 1, kind: input, shape index: {}]
  %s2 = inlined_call_operand.vmem [shape: f32[1,4,1], index: 2, kind: input, shape index: {}]
  %s3 = inlined_call_operand.vmem [shape: f32[2,4,256], index: 3, kind: output, shape index: {}]
  %s4 = sld [smem:[#allocation0]]
  $region22: #{batchnorm2d_bin_forward.1} parent=0
    _
  %s6 = ssub.s32 1, %s4
  %s7 = scalar_select 0, %s6, %s4
  // Predicated region
  $region2: #{batchnorm2d_bin_forward.1} parent=0 // pred_check
    _
  $region3: #{batchnorm2d_bin_forward.1} parent=0 // pred_check_branch
    %9 = sbr.rel (0) target = $region5
  $region4: #{batchnorm2d_bin_forward.1} parent=0 // pred_region
    _
  $region5: #{batchnorm2d_bin_forward.1} parent=0 // pred_fallthru
    _
  // Predicated region
  $region6: #{batchnorm2d_bin_forward.1} parent=0 // pred_check
    _
  $region7: #{batchnorm2d_bin_forward.1} parent=0 // pred_check_branch
    %11 = sbr.rel (0) target = $region9
  $region8: #{batchnorm2d_bin_forward.1} parent=0 // pred_region
    _
  $region9: #{batchnorm2d_bin_forward.1} parent=0 // pred_fallthru
    _
  // Predicated region
  $region10: #{batchnorm2d_bin_forward.1} parent=0 // pred_check
    _
  $region11: #{batchnorm2d_bin_forward.1} parent=0 // pred_check_branch
    %13 = sbr.rel (0) target = $region13
  $region12: #{batchnorm2d_bin_forward.1} parent=0 // pred_region
    _
  $region13: #{batchnorm2d_bin_forward.1} parent=0 // pred_fallthru
    _
  %v14 = vld [vmem:[%s0] sm:$0xff]
  %v15 = vld [vmem:[%s0 + $0x8] sm:$0xff]
  %v18 = vcombine.high %v14, %v14
  %v19 = vcombine.high %v15, %v15
  %vm22 = vcmask 1043456
  %v23 = vsel %vm22, %v14, 0.0
  %v24 = vsel %vm22, %v18, 0.0
  %v25 = vadd.f32 %v23, %v24
  %26 = vadd.xlane.f32.xlu0 %v25
  %v27 = vpop.xlane.xlu0 %26
  %v28 = vsel %vm22, %v15, 0.0
  %v29 = vsel %vm22, %v19, 0.0
  %v30 = vadd.f32 %v28, %v29
  %31 = vadd.xlane.f32.xlu0 %v30
  %v32 = vpop.xlane.xlu0 %31
  %v33 = vadd.f32 %v27, %v32
  %v34 = vmul.f32 %v14, %v14
  %v35 = vmul.f32 %v15, %v15
  %v38 = vcombine.high %v34, %v34
  %v39 = vcombine.high %v35, %v35
  %v42 = vsel %vm22, %v34, 0.0
  %v43 = vsel %vm22, %v38, 0.0
  %v44 = vadd.f32 %v42, %v43
  %45 = vadd.xlane.f32.xlu0 %v44
  %v46 = vpop.xlane.xlu0 %45
  %v47 = vsel %vm22, %v35, 0.0
  %v48 = vsel %vm22, %v39, 0.0
  %v49 = vadd.f32 %v47, %v48
  %50 = vadd.xlane.f32.xlu0 %v49
  %v51 = vpop.xlane.xlu0 %50
  %v52 = vadd.f32 %v46, %v51
  %v53 = vld [vmem:[%s1] sm:$0xf]
  %v54 = vld [vmem:[%s2] sm:$0xf]
  %v55 = vmul.f32 %v33, 0.001953125
  %v56 = vmul.f32 %v52, 0.001953125
  %v57 = vmul.f32 %v55, %v55
  %v58 = vsub.f32 %v56, %v57
  %v59 = vmax.f32 %v58, 0.0
  %v60 = vadd.f32 %v59, 1e-05
  %v61 = vrsqrt.pop %v60
  %v62 = vmul.f32 %v61, %v53
  %v63 = vmul.f32 %v55, %v62
  %v64 = vsub.f32 %v54, %v63
  %66 = vset.pattern.permute.xlu0 0
  %67 = vperm.xlu0 %66, %v62
  %v68 = vpop.permute.xlu0 %67
  %v70 = vunpack.c.l.s4 839922192
  %v71 = vunpack.c.0.s8 %v70
  %v72 = vlaneseq
  %v73 = vshrl.u32 %v72, 7
  %v74 = vsub.s32 %v71, %v73
  %v75 = vrot.slane %v68, %v74
  %v77 = vmul.f32 %v14, %v75
  %v78 = vmul.f32 %v15, %v75
  %80 = vset.pattern.permute.xlu0 0
  %81 = vperm.xlu0 %80, %v64
  %v82 = vpop.permute.xlu0 %81
  %v84 = vunpack.c.l.s4 839922192
  %v85 = vunpack.c.0.s8 %v84
  %v86 = vlaneseq
  %v87 = vshrl.u32 %v86, 7
  %v88 = vsub.s32 %v85, %v87
  %v89 = vrot.slane %v82, %v88
  %v91 = vadd.f32 %v77, %v89
  %v92 = vadd.f32 %v78, %v89
  %93 = vst [vmem:[%s3] sm:$0xff] %v91
  %94 = vst [vmem:[%s3 + $0x8] sm:$0xff] %v92
  // Predicated region
  $region14: #{batchnorm2d_bin_forward.1} parent=0 // pred_check
    _
  $region15: #{batchnorm2d_bin_forward.1} parent=0 // pred_check_branch
    %96 = sbr.rel (0) target = $region17
  $region16: #{batchnorm2d_bin_forward.1} parent=0 // pred_region
    _
  $region17: #{batchnorm2d_bin_forward.1} parent=0 // pred_fallthru
    _
  // Predicated region
  $region18: #{batchnorm2d_bin_forward.1} parent=0 // pred_check
    _
  $region19: #{batchnorm2d_bin_forward.1} parent=0 // pred_check_branch
    %98 = sbr.rel (0) target = $region21
  $region20: #{batchnorm2d_bin_forward.1} parent=0 // pred_region
    _
  $region21: #{batchnorm2d_bin_forward.1} parent=0 // pred_fallthru
    _

</llo_original>
